<compile_context>
chip_gen: v5e
topology: v5e:2x2
jax: 0.10.0
libtpu: 0.0.40
codegen_flags: <defaults>
</compile_context>

<pallas_src>
import functools
import math

import jax
import jax.numpy as jnp
from jax.experimental import pallas as pl
from jax.experimental.pallas import tpu as pltpu


def _gate_add_norm_kernel(
    x_ref,      # [TILE_N, I]   (mxu dtype)
    skip_ref,   # [TILE_N, I]   (input dtype)
    w12_ref,    # [I, 2I]       fused GLU weight (fc1 || fc2), (in, out) layout
    b12_ref,    # [1, 2I]
    *rest,      # (wp_ref [I,O], bp_ref [1,O])?, gamma_ref [1,O], beta_ref [1,O], out_ref [TILE_N,O]
    eps: float,
    input_size: int,
    output_size: int,
    has_projection: bool,
):
    if has_projection:
        wp_ref, bp_ref, gamma_ref, beta_ref, out_ref = rest
    else:
        gamma_ref, beta_ref, out_ref = rest

    # --- fused GLU matmul: one MXU pass of output width 2I, f32 accumulation ---
    ab = jnp.dot(x_ref[...], w12_ref[...], preferred_element_type=jnp.float32)
    ab = ab + b12_ref[...].astype(jnp.float32)
    a = ab[:, :input_size]          # lane-aligned static views when I % 128 == 0
    b = ab[:, input_size:]
    gated = a * jax.nn.sigmoid(b)   # f32 elementwise (sigmoid on the EUP)

    # --- residual add (before projection, matching the PyTorch module) ---
    y = gated + skip_ref[...].astype(jnp.float32)

    # --- projection (statically elided when input_size == output_size) ---
    if has_projection:
        z = jnp.dot(y.astype(wp_ref.dtype), wp_ref[...],
                    preferred_element_type=jnp.float32)
        z = z + bp_ref[...].astype(jnp.float32)
    else:
        z = y

    # --- LayerNorm over last dim: fused single-pass statistics (f32) ---
    inv_o = jnp.float32(1.0 / output_size)
    mean = jnp.sum(z, axis=-1, keepdims=True) * inv_o
    mean_sq = jnp.sum(z * z, axis=-1, keepdims=True) * inv_o
    var = jnp.maximum(mean_sq - mean * mean, 0.0)
    inv = jax.lax.rsqrt(var + eps)
    normed = (z - mean) * inv * gamma_ref[...].astype(jnp.float32) \
        + beta_ref[...].astype(jnp.float32)

    out_ref[...] = normed.astype(out_ref.dtype)


def _round_up(v: int, m: int) -> int:
    return ((v + m - 1) // m) * m


def _choose_tile_n(n_rows, in_feat, out_feat, mxu_isz, skip_isz, out_isz,
                   budget_bytes=6 << 20):
    """Row-tile size sized to an activation VMEM budget safe on v5e/v6e/v7x."""
    # Double-buffered streaming tiles (x / skip / out) + f32 intermediates
    # (ab: 2I, y: I, z: O) per row.
    per_row = 2 * (in_feat * mxu_isz + in_feat * skip_isz + out_feat * out_isz)
    per_row += 4 * (2 * in_feat + in_feat + out_feat)
    t = int(budget_bytes // max(per_row, 1))
    t = max(16, min(t, 4096))
    if t >= 256:
        t = (t // 128) * 128       # MXU M granularity for large tiles
    else:
        t = (t // 16) * 16         # bf16 packs 16 rows per sublane group
    if n_rows <= t:
        return n_rows              # one block; block dim == full array dim is always legal
    return t


def _vmem_limit_bytes(tile_n, in_feat, out_feat, mxu_isz, skip_isz, out_isz,
                      has_projection, weight_bufs):
    stream = 2 * tile_n * (in_feat * mxu_isz + in_feat * skip_isz
                           + out_feat * out_isz)              # double-buffered tiles
    weights = 2 * in_feat * in_feat * mxu_isz + 2 * in_feat * 4   # w12 + b12
    weights += 2 * out_feat * 4                                   # gamma + beta
    if has_projection:
        weights += in_feat * out_feat * mxu_isz + out_feat * 4
    weights *= weight_bufs
    interm = tile_n * (2 * in_feat + in_feat + out_feat) * 4      # f32 temporaries
    total = stream + weights + interm + (8 << 20)                 # compiler-scratch headroom
    return int(min(64 << 20, max(32 << 20, total)))               # cap at v7x physical VMEM


def gate_add_norm(x, skip_a, params, *, eps=1e-5, mxu_dtype=jnp.bfloat16,
                  tile_n=None):
    """x, skip_a: [B, T, input_size] -> [B, T, output_size]."""
    B, T, I = x.shape
    has_projection = "wp" in params
    O = params["wp"].shape[1] if has_projection else I
    N = B * T

    mdt = jnp.dtype(x.dtype) if mxu_dtype is None else jnp.dtype(mxu_dtype)

    # Flatten rows; cast MXU operands once in the wrapper (halves weight DMA /
    # residency and keeps the kernel's matmuls on the native bf16 MXU path).
    x2 = x.reshape(N, I).astype(mdt)
    s2 = skip_a.reshape(N, I)

    # Pack GLU fc1/fc2 into one fused weight/bias (one MXU pass in-kernel).
    w12 = jnp.concatenate([params["w1"], params["w2"]], axis=1).astype(mdt)
    b12 = jnp.concatenate([params["b1"], params["b2"]], axis=0).reshape(1, 2 * I)
    gamma = params["gamma"].reshape(1, O)
    beta = params["beta"].reshape(1, O)
    wp = params["wp"].astype(mdt) if has_projection else None
    bp = params["bp"].reshape(1, O) if has_projection else None

    mxu_isz = mdt.itemsize
    skip_isz = s2.dtype.itemsize
    out_isz = jnp.dtype(x.dtype).itemsize

    TILE_N = tile_n if tile_n is not None else _choose_tile_n(
        N, I, O, mxu_isz, skip_isz, out_isz)
    # Ragged final tile: rows are independent and Pallas masks OOB writes of the
    # last block, so no host-side padding copy of the activations is needed.
    n_tiles = pl.cdiv(N, TILE_N)

    kernel = functools.partial(
        _gate_add_norm_kernel, eps=eps, input_size=I, output_size=O,
        has_projection=has_projection)

    def _call(single_buffer_consts: bool):
        def const_spec(shape):
            # Constant index_map -> block is VMEM-resident across grid steps;
            # single-buffer it so the second pipeline buffer isn't wasted.
            if single_buffer_consts:
                return pl.BlockSpec(shape, lambda i: (0, 0),
                                    pipeline_mode=pl.Buffered(buffer_count=1))
            return pl.BlockSpec(shape, lambda i: (0, 0))

        in_specs = [
            pl.BlockSpec((TILE_N, I), lambda i: (i, 0)),   # x tile (streamed)
            pl.BlockSpec((TILE_N, I), lambda i: (i, 0)),   # skip tile (streamed)
            const_spec((I, 2 * I)),                        # fused GLU weight
            const_spec((1, 2 * I)),                        # fused GLU bias
        ]
        operands = [x2, s2, w12, b12]
        if has_projection:
            in_specs += [const_spec((I, O)), const_spec((1, O))]
            operands += [wp, bp]
        in_specs += [const_spec((1, O)), const_spec((1, O))]   # gamma, beta
        operands += [gamma, beta]

        vmem_limit = _vmem_limit_bytes(
            TILE_N, I, O, mxu_isz, skip_isz, out_isz, has_projection,
            weight_bufs=1 if single_buffer_consts else 2)

        return pl.pallas_call(
            kernel,
            out_shape=jax.ShapeDtypeStruct((N, O), x.dtype),
            grid=(n_tiles,),
            in_specs=in_specs,
            out_specs=pl.BlockSpec((TILE_N, O), lambda i: (i, 0)),
            compiler_params=pltpu.CompilerParams(
                dimension_semantics=("parallel",),   # row tiles are independent
                vmem_limit_bytes=vmem_limit,
            ),
        )(*operands)

    try:
        out = _call(single_buffer_consts=True)
    except Exception:
        # This jax build rejected pipeline_mode=pl.Buffered(1); fall back to the
        # default double-buffered constants (correctness unaffected).
        out = _call(single_buffer_consts=False)

    return out.reshape(B, T, O)


def init_params(key, input_size, output_size, dtype=jnp.float32):
    """Deterministic synthetic init mirroring the module's parameter shapes."""
    k1, k2, k3, k4, k5, k6 = jax.random.split(key, 6)
    scale_i = 1.0 / math.sqrt(input_size)
    params = {
        # GLU fc1 / fc2: Linear(input_size, input_size); stored as (in, out)
        "w1": jax.random.uniform(k1, (input_size, input_size), dtype, -scale_i, scale_i),
        "b1": jax.random.uniform(k2, (input_size,), dtype, -scale_i, scale_i),
        "w2": jax.random.uniform(k3, (input_size, input_size), dtype, -scale_i, scale_i),
        "b2": jax.random.uniform(k4, (input_size,), dtype, -scale_i, scale_i),
        # LayerNorm(output_size)
        "gamma": jnp.ones((output_size,), dtype),
        "beta": jnp.zeros((output_size,), dtype),
    }
    if input_size != output_size:
        params["wp"] = jax.random.uniform(
            k5, (input_size, output_size), dtype, -scale_i, scale_i)
        params["bp"] = jax.random.uniform(k6, (output_size,), dtype, -scale_i, scale_i)
    # input_size == output_size -> nn.Identity() projection: no wp/bp (elided)
    return params


def gate_add_norm_ref(x, skip_a, params, *, eps=1e-5, mxu_dtype=None):
    """Pure-JAX reference matching the PyTorch forward.

    mxu_dtype mirrors the kernel's mixed-precision policy (cast matmul operands,
    accumulate in f32); mxu_dtype=None is the full-f32 reference.
    """
    def c(v):
        return v if mxu_dtype is None else v.astype(mxu_dtype)
    f32 = jnp.float32
    a = jnp.dot(c(x), c(params["w1"]), preferred_element_type=f32) + params["b1"].astype(f32)
    b = jnp.dot(c(x), c(params["w2"]), preferred_element_type=f32) + params["b2"].astype(f32)
    g = a * jax.nn.sigmoid(b)
    y = g + skip_a.astype(f32)
    if "wp" in params:
        z = jnp.dot(c(y), c(params["wp"]), preferred_element_type=f32) + params["bp"].astype(f32)
    else:
        z = y
    mean = jnp.mean(z, axis=-1, keepdims=True)
    var = jnp.mean((z - mean) ** 2, axis=-1, keepdims=True)
    out = (z - mean) * jax.lax.rsqrt(var + eps) * params["gamma"].astype(f32) \
        + params["beta"].astype(f32)
    return out.astype(x.dtype)


if __name__ == "__main__":
    B, T = 2, 8
    key = jax.random.PRNGKey(0)
    kx, ks, kp1, kp2, kx3, ks3, kp3 = jax.random.split(key, 7)

    # Case 1: projection path (input_size != output_size), lane-dense features.
    I1, O1 = 128, 256
    x1 = jax.random.normal(kx, (B, T, I1), jnp.float32)
    s1 = jax.random.normal(ks, (B, T, I1), jnp.float32)
    p1 = init_params(kp1, I1, O1)
    out1 = jax.block_until_ready(gate_add_norm(x1, s1, p1))
    ref1 = gate_add_norm_ref(x1, s1, p1, mxu_dtype=jnp.bfloat16)   # same precision policy
    assert out1.shape == (B, T, O1)
    assert jnp.allclose(out1, ref1, atol=2e-3, rtol=2e-3), "mismatch (projection path)"
    ref1_f32 = gate_add_norm_ref(x1, s1, p1)                       # full-f32 semantics check
    assert jnp.allclose(out1, ref1_f32, atol=0.15, rtol=0.0), "mismatch vs f32 reference"

    # Case 2: identity projection path (input_size == output_size), elided in-kernel.
    I2 = 128
    x2 = jax.random.normal(kx, (B, T, I2), jnp.float32)
    s2 = jax.random.normal(ks, (B, T, I2), jnp.float32)
    p2 = init_params(kp2, I2, I2)
    out2 = jax.block_until_ready(gate_add_norm(x2, s2, p2))
    ref2 = gate_add_norm_ref(x2, s2, p2, mxu_dtype=jnp.bfloat16)
    assert out2.shape == (B, T, I2)
    assert jnp.allclose(out2, ref2, atol=2e-3, rtol=2e-3), "mismatch (identity path)"

    # Case 3: ragged grid (N = 21 rows, TILE_N = 16) -> relies on Pallas masking
    # the final block's out-of-bounds writes (no host-side padding copy).
    B3, T3, I3 = 3, 7, 128
    x3 = jax.random.normal(kx3, (B3, T3, I3), jnp.float32)
    s3 = jax.random.normal(ks3, (B3, T3, I3), jnp.float32)
    p3 = init_params(kp3, I3, I3)
    out3 = jax.block_until_ready(gate_add_norm(x3, s3, p3, tile_n=16))
    ref3 = gate_add_norm_ref(x3, s3, p3, mxu_dtype=jnp.bfloat16)
    assert out3.shape == (B3, T3, I3)
    assert jnp.allclose(out3, ref3, atol=2e-3, rtol=2e-3), "mismatch (ragged grid path)"

    print("KERNEL_OK")
</pallas_src>

<mosaic_0001>
module attributes {stable_mosaic.version = 11 : i64} {
  func.func @_gate_add_norm_kernel(%arg0: i32, %arg1: memref<16x128xbf16, #tpu.memory_space<vmem>>, %arg2: memref<16x128xf32, #tpu.memory_space<vmem>>, %arg3: memref<128x256xbf16, #tpu.memory_space<vmem>>, %arg4: memref<1x256xf32, #tpu.memory_space<vmem>>, %arg5: memref<128x256xbf16, #tpu.memory_space<vmem>>, %arg6: memref<1x256xf32, #tpu.memory_space<vmem>>, %arg7: memref<1x256xf32, #tpu.memory_space<vmem>>, %arg8: memref<1x256xf32, #tpu.memory_space<vmem>>, %arg9: memref<16x256xf32, #tpu.memory_space<vmem>>) attributes {dimension_semantics = [#tpu.dimension_semantics<parallel>], iteration_bounds = array<i64: 1>, scalar_prefetch = 0 : i64, scratch_operands = 0 : i64, tpu.core_type = #tpu.core_type<tc>, window_params = [{transform_indices = @transform_0, window_bounds = array<i64: 16, 128>}, {transform_indices = @transform_1, window_bounds = array<i64: 16, 128>}, {pipeline_mode = #tpu.pipeline_mode<synchronous>, transform_indices = @transform_2, window_bounds = array<i64: 128, 256>}, {pipeline_mode = #tpu.pipeline_mode<synchronous>, transform_indices = @transform_3, window_bounds = array<i64: 1, 256>}, {pipeline_mode = #tpu.pipeline_mode<synchronous>, transform_indices = @transform_4, window_bounds = array<i64: 128, 256>}, {pipeline_mode = #tpu.pipeline_mode<synchronous>, transform_indices = @transform_5, window_bounds = array<i64: 1, 256>}, {pipeline_mode = #tpu.pipeline_mode<synchronous>, transform_indices = @transform_6, window_bounds = array<i64: 1, 256>}, {pipeline_mode = #tpu.pipeline_mode<synchronous>, transform_indices = @transform_7, window_bounds = array<i64: 1, 256>}, {transform_indices = @transform_8, window_bounds = array<i64: 16, 256>}]} {
    %c0 = arith.constant 0 : index
    %c0_0 = arith.constant 0 : index
    %0 = vector.load %arg1[%c0, %c0_0] : memref<16x128xbf16, #tpu.memory_space<vmem>>, vector<16x128xbf16>
    %c0_1 = arith.constant 0 : index
    %c0_2 = arith.constant 0 : index
    %1 = vector.load %arg3[%c0_1, %c0_2] : memref<128x256xbf16, #tpu.memory_space<vmem>>, vector<128x256xbf16>
    %cst = arith.constant dense<0.000000e+00> : vector<16x256xf32>
    %2 = tpu.matmul %0, %1, %cst {dimension_numbers = #tpu.dot_dimension_numbers<[1], [0], [0], [1], [0, 0, 1, 1], [], []>} : vector<16x128xbf16>, vector<128x256xbf16>, vector<16x256xf32> -> vector<16x256xf32>
    %c0_3 = arith.constant 0 : index
    %c0_4 = arith.constant 0 : index
    %3 = vector.load %arg4[%c0_3, %c0_4] : memref<1x256xf32, #tpu.memory_space<vmem>>, vector<1x256xf32>
    %4 = vector.broadcast %3 : vector<1x256xf32> to vector<16x256xf32>
    %5 = arith.addf %2, %4 : vector<16x256xf32>
    %6 = vector.extract_strided_slice %5 {offsets = [0, 0], sizes = [16, 128], strides = [1, 1]} : vector<16x256xf32> to vector<16x128xf32>
    %7 = vector.extract_strided_slice %5 {offsets = [0, 128], sizes = [16, 128], strides = [1, 1]} : vector<16x256xf32> to vector<16x128xf32>
    %8 = arith.negf %7 : vector<16x128xf32>
    %9 = math.exp %8 : vector<16x128xf32>
    %cst_5 = arith.constant 1.000000e+00 : f32
    %10 = vector.broadcast %cst_5 : f32 to vector<16x128xf32>
    %11 = arith.addf %10, %9 : vector<16x128xf32>
    %12 = arith.divf %10, %11 : vector<16x128xf32>
    %13 = arith.mulf %6, %12 : vector<16x128xf32>
    %c0_6 = arith.constant 0 : index
    %c0_7 = arith.constant 0 : index
    %14 = vector.load %arg2[%c0_6, %c0_7] : memref<16x128xf32, #tpu.memory_space<vmem>>, vector<16x128xf32>
    %15 = arith.addf %13, %14 : vector<16x128xf32>
    %16 = arith.truncf %15 : vector<16x128xf32> to vector<16x128xbf16>
    %c0_8 = arith.constant 0 : index
    %c0_9 = arith.constant 0 : index
    %17 = vector.load %arg5[%c0_8, %c0_9] : memref<128x256xbf16, #tpu.memory_space<vmem>>, vector<128x256xbf16>
    %cst_10 = arith.constant dense<0.000000e+00> : vector<16x256xf32>
    %18 = tpu.matmul %16, %17, %cst_10 {dimension_numbers = #tpu.dot_dimension_numbers<[1], [0], [0], [1], [0, 0, 1, 1], [], []>} : vector<16x128xbf16>, vector<128x256xbf16>, vector<16x256xf32> -> vector<16x256xf32>
    %c0_11 = arith.constant 0 : index
    %c0_12 = arith.constant 0 : index
    %19 = vector.load %arg6[%c0_11, %c0_12] : memref<1x256xf32, #tpu.memory_space<vmem>>, vector<1x256xf32>
    %20 = vector.broadcast %19 : vector<1x256xf32> to vector<16x256xf32>
    %21 = arith.addf %18, %20 : vector<16x256xf32>
    %cst_13 = arith.constant dense<0.000000e+00> : vector<16xf32>
    %22 = vector.multi_reduction <add>, %21, %cst_13 [1] : vector<16x256xf32> to vector<16xf32>
    %23 = vector.shape_cast %22 : vector<16xf32> to vector<16x1xf32>
    %cst_14 = arith.constant 3.906250e-03 : f32
    %24 = vector.broadcast %cst_14 : f32 to vector<16x1xf32>
    %25 = arith.mulf %23, %24 : vector<16x1xf32>
    %26 = arith.mulf %21, %21 : vector<16x256xf32>
    %cst_15 = arith.constant dense<0.000000e+00> : vector<16xf32>
    %27 = vector.multi_reduction <add>, %26, %cst_15 [1] : vector<16x256xf32> to vector<16xf32>
    %28 = vector.shape_cast %27 : vector<16xf32> to vector<16x1xf32>
    %cst_16 = arith.constant 3.906250e-03 : f32
    %29 = vector.broadcast %cst_16 : f32 to vector<16x1xf32>
    %30 = arith.mulf %28, %29 : vector<16x1xf32>
    %31 = arith.mulf %25, %25 : vector<16x1xf32>
    %32 = arith.subf %30, %31 : vector<16x1xf32>
    %cst_17 = arith.constant 0.000000e+00 : f32
    %33 = vector.broadcast %cst_17 : f32 to vector<16x1xf32>
    %34 = arith.maximumf %32, %33 : vector<16x1xf32>
    %cst_18 = arith.constant 9.99999974E-6 : f32
    %35 = vector.broadcast %cst_18 : f32 to vector<16x1xf32>
    %36 = arith.addf %34, %35 : vector<16x1xf32>
    %37 = math.rsqrt %36 : vector<16x1xf32>
    %38 = vector.broadcast %25 : vector<16x1xf32> to vector<16x256xf32>
    %39 = arith.subf %21, %38 : vector<16x256xf32>
    %40 = vector.broadcast %37 : vector<16x1xf32> to vector<16x256xf32>
    %41 = arith.mulf %39, %40 : vector<16x256xf32>
    %c0_19 = arith.constant 0 : index
    %c0_20 = arith.constant 0 : index
    %42 = vector.load %arg7[%c0_19, %c0_20] : memref<1x256xf32, #tpu.memory_space<vmem>>, vector<1x256xf32>
    %43 = vector.broadcast %42 : vector<1x256xf32> to vector<16x256xf32>
    %44 = arith.mulf %41, %43 : vector<16x256xf32>
    %c0_21 = arith.constant 0 : index
    %c0_22 = arith.constant 0 : index
    %45 = vector.load %arg8[%c0_21, %c0_22] : memref<1x256xf32, #tpu.memory_space<vmem>>, vector<1x256xf32>
    %46 = vector.broadcast %45 : vector<1x256xf32> to vector<16x256xf32>
    %47 = arith.addf %44, %46 : vector<16x256xf32>
    %c0_23 = arith.constant 0 : index
    %c0_24 = arith.constant 0 : index
    %48 = vector.load %arg9[%c0_23, %c0_24] : memref<16x256xf32, #tpu.memory_space<vmem>>, vector<16x256xf32>
    tpu.vector_store %arg9[%c0_23, %c0_24], %47 {strides = array<i32>} : memref<16x256xf32, #tpu.memory_space<vmem>>, vector<16x256xf32>,
    return
  }
  func.func @transform_0(%arg0: i32) -> (i32, i32) {
    %c0_i32 = arith.constant 0 : i32
    %c0_i32_0 = arith.constant 0 : i32
    return %arg0, %c0_i32 : i32, i32
  }
  func.func @transform_1(%arg0: i32) -> (i32, i32) {
    %c0_i32 = arith.constant 0 : i32
    %c0_i32_0 = arith.constant 0 : i32
    return %arg0, %c0_i32 : i32, i32
  }
  func.func @transform_2(%arg0: i32) -> (i32, i32) {
    %c0_i32 = arith.constant 0 : i32
    %c0_i32_0 = arith.constant 0 : i32
    %c0_i32_1 = arith.constant 0 : i32
    return %c0_i32, %c0_i32_0 : i32, i32
  }
  func.func @transform_3(%arg0: i32) -> (i32, i32) {
    %c0_i32 = arith.constant 0 : i32
    %c0_i32_0 = arith.constant 0 : i32
    %c0_i32_1 = arith.constant 0 : i32
    return %c0_i32, %c0_i32_0 : i32, i32
  }
  func.func @transform_4(%arg0: i32) -> (i32, i32) {
    %c0_i32 = arith.constant 0 : i32
    %c0_i32_0 = arith.constant 0 : i32
    %c0_i32_1 = arith.constant 0 : i32
    return %c0_i32, %c0_i32_0 : i32, i32
  }
  func.func @transform_5(%arg0: i32) -> (i32, i32) {
    %c0_i32 = arith.constant 0 : i32
    %c0_i32_0 = arith.constant 0 : i32
    %c0_i32_1 = arith.constant 0 : i32
    return %c0_i32, %c0_i32_0 : i32, i32
  }
  func.func @transform_6(%arg0: i32) -> (i32, i32) {
    %c0_i32 = arith.constant 0 : i32
    %c0_i32_0 = arith.constant 0 : i32
    %c0_i32_1 = arith.constant 0 : i32
    return %c0_i32, %c0_i32_0 : i32, i32
  }
  func.func @transform_7(%arg0: i32) -> (i32, i32) {
    %c0_i32 = arith.constant 0 : i32
    %c0_i32_0 = arith.constant 0 : i32
    %c0_i32_1 = arith.constant 0 : i32
    return %c0_i32, %c0_i32_0 : i32, i32
  }
  func.func @transform_8(%arg0: i32) -> (i32, i32) {
    %c0_i32 = arith.constant 0 : i32
    %c0_i32_0 = arith.constant 0 : i32
    return %arg0, %c0_i32 : i32, i32
  }
}

module attributes {stable_mosaic.version = 11 : i64} {
  func.func @_gate_add_norm_kernel(%arg0: i32, %arg1: memref<16x128xbf16, #tpu.memory_space<vmem>>, %arg2: memref<16x128xf32, #tpu.memory_space<vmem>>, %arg3: memref<128x256xbf16, #tpu.memory_space<vmem>>, %arg4: memref<1x256xf32, #tpu.memory_space<vmem>>, %arg5: memref<128x256xbf16, #tpu.memory_space<vmem>>, %arg6: memref<1x256xf32, #tpu.memory_space<vmem>>, %arg7: memref<1x256xf32, #tpu.memory_space<vmem>>, %arg8: memref<1x256xf32, #tpu.memory_space<vmem>>, %arg9: memref<16x256xf32, #tpu.memory_space<vmem>>) attributes {dimension_semantics = [#tpu.dimension_semantics<parallel>], iteration_bounds = array<i64: 1>, scalar_prefetch = 0 : i64, scratch_operands = 0 : i64, tpu.core_type = #tpu.core_type<tc>, window_params = [{transform_indices = @transform_0, window_bounds = array<i64: 16, 128>}, {transform_indices = @transform_1, window_bounds = array<i64: 16, 128>}, {pipeline_mode = #tpu.pipeline_mode<synchronous>, transform_indices = @transform_2, window_bounds = array<i64: 128, 256>}, {pipeline_mode = #tpu.pipeline_mode<synchronous>, transform_indices = @transform_3, window_bounds = array<i64: 1, 256>}, {pipeline_mode = #tpu.pipeline_mode<synchronous>, transform_indices = @transform_4, window_bounds = array<i64: 128, 256>}, {pipeline_mode = #tpu.pipeline_mode<synchronous>, transform_indices = @transform_5, window_bounds = array<i64: 1, 256>}, {pipeline_mode = #tpu.pipeline_mode<synchronous>, transform_indices = @transform_6, window_bounds = array<i64: 1, 256>}, {pipeline_mode = #tpu.pipeline_mode<synchronous>, transform_indices = @transform_7, window_bounds = array<i64: 1, 256>}, {transform_indices = @transform_8, window_bounds = array<i64: 16, 256>}]} {
    %c0 = arith.constant 0 : index
    %c0_0 = arith.constant 0 : index
    %0 = vector.load %arg1[%c0, %c0_0] : memref<16x128xbf16, #tpu.memory_space<vmem>>, vector<16x128xbf16>
    %c0_1 = arith.constant 0 : index
    %c0_2 = arith.constant 0 : index
    %1 = vector.load %arg3[%c0_1, %c0_2] : memref<128x256xbf16, #tpu.memory_space<vmem>>, vector<128x256xbf16>
    %cst = arith.constant dense<0.000000e+00> : vector<16x256xf32>
    %2 = tpu.matmul %0, %1, %cst {dimension_numbers = #tpu.dot_dimension_numbers<[1], [0], [0], [1], [0, 0, 1, 1], [], []>} : vector<16x128xbf16>, vector<128x256xbf16>, vector<16x256xf32> -> vector<16x256xf32>
    %c0_3 = arith.constant 0 : index
    %c0_4 = arith.constant 0 : index
    %3 = vector.load %arg4[%c0_3, %c0_4] : memref<1x256xf32, #tpu.memory_space<vmem>>, vector<1x256xf32>
    %4 = vector.broadcast %3 : vector<1x256xf32> to vector<16x256xf32>
    %5 = arith.addf %2, %4 : vector<16x256xf32>
    %6 = vector.extract_strided_slice %5 {offsets = [0, 0], sizes = [16, 128], strides = [1, 1]} : vector<16x256xf32> to vector<16x128xf32>
    %7 = vector.extract_strided_slice %5 {offsets = [0, 128], sizes = [16, 128], strides = [1, 1]} : vector<16x256xf32> to vector<16x128xf32>
    %8 = arith.negf %7 : vector<16x128xf32>
    %9 = math.exp %8 : vector<16x128xf32>
    %cst_5 = arith.constant 1.000000e+00 : f32
    %10 = vector.broadcast %cst_5 : f32 to vector<16x128xf32>
    %11 = arith.addf %10, %9 : vector<16x128xf32>
    %12 = arith.divf %10, %11 : vector<16x128xf32>
    %13 = arith.mulf %6, %12 : vector<16x128xf32>
    %c0_6 = arith.constant 0 : index
    %c0_7 = arith.constant 0 : index
    %14 = vector.load %arg2[%c0_6, %c0_7] : memref<16x128xf32, #tpu.memory_space<vmem>>, vector<16x128xf32>
    %15 = arith.addf %13, %14 : vector<16x128xf32>
    %16 = arith.truncf %15 : vector<16x128xf32> to vector<16x128xbf16>
    %c0_8 = arith.constant 0 : index
    %c0_9 = arith.constant 0 : index
    %17 = vector.load %arg5[%c0_8, %c0_9] : memref<128x256xbf16, #tpu.memory_space<vmem>>, vector<128x256xbf16>
    %cst_10 = arith.constant dense<0.000000e+00> : vector<16x256xf32>
    %18 = tpu.matmul %16, %17, %cst_10 {dimension_numbers = #tpu.dot_dimension_numbers<[1], [0], [0], [1], [0, 0, 1, 1], [], []>} : vector<16x128xbf16>, vector<128x256xbf16>, vector<16x256xf32> -> vector<16x256xf32>
    %c0_11 = arith.constant 0 : index
    %c0_12 = arith.constant 0 : index
    %19 = vector.load %arg6[%c0_11, %c0_12] : memref<1x256xf32, #tpu.memory_space<vmem>>, vector<1x256xf32>
    %20 = vector.broadcast %19 : vector<1x256xf32> to vector<16x256xf32>
    %21 = arith.addf %18, %20 : vector<16x256xf32>
    %cst_13 = arith.constant dense<0.000000e+00> : vector<16xf32>
    %22 = vector.multi_reduction <add>, %21, %cst_13 [1] : vector<16x256xf32> to vector<16xf32>
    %23 = vector.shape_cast %22 : vector<16xf32> to vector<16x1xf32>
    %cst_14 = arith.constant 3.906250e-03 : f32
    %24 = vector.broadcast %cst_14 : f32 to vector<16x1xf32>
    %25 = arith.mulf %23, %24 : vector<16x1xf32>
    %26 = arith.mulf %21, %21 : vector<16x256xf32>
    %cst_15 = arith.constant dense<0.000000e+00> : vector<16xf32>
    %27 = vector.multi_reduction <add>, %26, %cst_15 [1] : vector<16x256xf32> to vector<16xf32>
    %28 = vector.shape_cast %27 : vector<16xf32> to vector<16x1xf32>
    %cst_16 = arith.constant 3.906250e-03 : f32
    %29 = vector.broadcast %cst_16 : f32 to vector<16x1xf32>
    %30 = arith.mulf %28, %29 : vector<16x1xf32>
    %31 = arith.mulf %25, %25 : vector<16x1xf32>
    %32 = arith.subf %30, %31 : vector<16x1xf32>
    %cst_17 = arith.constant 0.000000e+00 : f32
    %33 = vector.broadcast %cst_17 : f32 to vector<16x1xf32>
    %34 = arith.maximumf %32, %33 : vector<16x1xf32>
    %cst_18 = arith.constant 9.99999974E-6 : f32
    %35 = vector.broadcast %cst_18 : f32 to vector<16x1xf32>
    %36 = arith.addf %34, %35 : vector<16x1xf32>
    %37 = math.rsqrt %36 : vector<16x1xf32>
    %38 = vector.broadcast %25 : vector<16x1xf32> to vector<16x256xf32>
    %39 = arith.subf %21, %38 : vector<16x256xf32>
    %40 = vector.broadcast %37 : vector<16x1xf32> to vector<16x256xf32>
    %41 = arith.mulf %39, %40 : vector<16x256xf32>
    %c0_19 = arith.constant 0 : index
    %c0_20 = arith.constant 0 : index
    %42 = vector.load %arg7[%c0_19, %c0_20] : memref<1x256xf32, #tpu.memory_space<vmem>>, vector<1x256xf32>
    %43 = vector.broadcast %42 : vector<1x256xf32> to vector<16x256xf32>
    %44 = arith.mulf %41, %43 : vector<16x256xf32>
    %c0_21 = arith.constant 0 : index
    %c0_22 = arith.constant 0 : index
    %45 = vector.load %arg8[%c0_21, %c0_22] : memref<1x256xf32, #tpu.memory_space<vmem>>, vector<1x256xf32>
    %46 = vector.broadcast %45 : vector<1x256xf32> to vector<16x256xf32>
    %47 = arith.addf %44, %46 : vector<16x256xf32>
    %c0_23 = arith.constant 0 : index
    %c0_24 = arith.constant 0 : index
    %48 = vector.load %arg9[%c0_23, %c0_24] : memref<16x256xf32, #tpu.memory_space<vmem>>, vector<16x256xf32>
    tpu.vector_store %arg9[%c0_23, %c0_24], %47 {strides = array<i32>} : memref<16x256xf32, #tpu.memory_space<vmem>>, vector<16x256xf32>,
    return
  }
  func.func @transform_0(%arg0: i32) -> (i32, i32) {
    %c0_i32 = arith.constant 0 : i32
    %c0_i32_0 = arith.constant 0 : i32
    return %arg0, %c0_i32 : i32, i32
  }
  func.func @transform_1(%arg0: i32) -> (i32, i32) {
    %c0_i32 = arith.constant 0 : i32
    %c0_i32_0 = arith.constant 0 : i32
    return %arg0, %c0_i32 : i32, i32
  }
  func.func @transform_2(%arg0: i32) -> (i32, i32) {
    %c0_i32 = arith.constant 0 : i32
    %c0_i32_0 = arith.constant 0 : i32
    %c0_i32_1 = arith.constant 0 : i32
    return %c0_i32, %c0_i32_0 : i32, i32
  }
  func.func @transform_3(%arg0: i32) -> (i32, i32) {
    %c0_i32 = arith.constant 0 : i32
    %c0_i32_0 = arith.constant 0 : i32
    %c0_i32_1 = arith.constant 0 : i32
    return %c0_i32, %c0_i32_0 : i32, i32
  }
  func.func @transform_4(%arg0: i32) -> (i32, i32) {
    %c0_i32 = arith.constant 0 : i32
    %c0_i32_0 = arith.constant 0 : i32
    %c0_i32_1 = arith.constant 0 : i32
    return %c0_i32, %c0_i32_0 : i32, i32
  }
  func.func @transform_5(%arg0: i32) -> (i32, i32) {
    %c0_i32 = arith.constant 0 : i32
    %c0_i32_0 = arith.constant 0 : i32
    %c0_i32_1 = arith.constant 0 : i32
    return %c0_i32, %c0_i32_0 : i32, i32
  }
  func.func @transform_6(%arg0: i32) -> (i32, i32) {
    %c0_i32 = arith.constant 0 : i32
    %c0_i32_0 = arith.constant 0 : i32
    %c0_i32_1 = arith.constant 0 : i32
    return %c0_i32, %c0_i32_0 : i32, i32
  }
  func.func @transform_7(%arg0: i32) -> (i32, i32) {
    %c0_i32 = arith.constant 0 : i32
    %c0_i32_0 = arith.constant 0 : i32
    %c0_i32_1 = arith.constant 0 : i32
    return %c0_i32, %c0_i32_0 : i32, i32
  }
  func.func @transform_8(%arg0: i32) -> (i32, i32) {
    %c0_i32 = arith.constant 0 : i32
    %c0_i32_0 = arith.constant 0 : i32
    return %arg0, %c0_i32 : i32, i32
  }
}

</mosaic_0001>

<llo_original>
// kernel: tpu_custom_call.1
$region0: #{tpu_custom_call.1}
  #allocation0 [shape = 'u32[]', space=smem, size = 0x4, offset = 0x4, fixed_abs, tag = 'smem constant byte address 0x4 - core index']
  #allocation1 [shape = 'u32[72,128]{1,0:T(1,128)}', space=vmem, size = 0x9000, scoped, tag = 'internal scratch']
  %s0 = inlined_call_operand.hbm [shape: bf16[16,128], index: 0, kind: input, shape index: {}]
  %s1 = inlined_call_operand.hbm [shape: f32[16,128], index: 1, kind: input, shape index: {}]
  %s2 = inlined_call_operand.hbm [shape: bf16[128,256], index: 2, kind: input, shape index: {}]
  %s3 = inlined_call_operand.vmem [shape: f32[1,256], index: 3, kind: input, shape index: {}]
  %s4 = inlined_call_operand.hbm [shape: bf16[128,256], index: 4, kind: input, shape index: {}]
  %s5 = inlined_call_operand.vmem [shape: f32[1,256], index: 5, kind: input, shape index: {}]
  %s6 = inlined_call_operand.hbm [shape: f32[1,256], index: 6, kind: input, shape index: {}]
  %s7 = inlined_call_operand.vmem [shape: f32[1,256], index: 7, kind: input, shape index: {}]
  %s8 = inlined_call_operand.hbm [shape: f32[16,256], index: 8, kind: output, shape index: {}]
  %s9 = sld [smem:[#allocation0]]
  $region62: #{tpu_custom_call.1} parent=0
    _
  %s11 = ssub.s32 1, %s9
  %s12 = scalar_select 0, %s11, %s9
  $region1: #{tpu_custom_call.1} parent=0
    #allocation2 [shape = 'u8[4096]{0}', space=vmem, size = 0x1000, scoped, tag = 'input window, operand 0, single buffered']
    #allocation3 [shape = 's32[1]{0}', space=sflag, size = 0x4, scoped, tag = 'scoped memory for tpu_custom_call.1']
    #allocation4 [shape = 's32[1]{0}', space=sflag, size = 0x4, scoped, tag = 'scoped memory for tpu_custom_call.1']
    #allocation5 [shape = 'u8[8192]{0}', space=vmem, size = 0x2000, scoped, tag = 'input window, operand 1, single buffered']
    #allocation6 [shape = 's32[1]{0}', space=sflag, size = 0x4, scoped, tag = 'scoped memory for tpu_custom_call.1']
    #allocation7 [shape = 'u8[65536]{0}', space=vmem, size = 0x10000, scoped, tag = 'input window, operand 2, single buffered']
    #allocation8 [shape = 'u8[65536]{0}', space=vmem, size = 0x10000, scoped, tag = 'input window, operand 4, single buffered']
    #allocation9 [shape = 's32[1]{0}', space=sflag, size = 0x4, scoped, tag = 'scoped memory for tpu_custom_call.1']
    #allocation10 [shape = 'u8[1024]{0}', space=vmem, size = 0x400, scoped, tag = 'input window, operand 6, single buffered']
    #allocation11 [shape = 'u8[16384]{0}', space=vmem, size = 0x4000, scoped, tag = 'output window, operand 0, single buffered']
    %13 = vsyncpa [#allocation3], 0
    %14 = vsyncpa [#allocation6], 0
    %15 = vsyncpa [#allocation9], 0
    %16 = vsyncpa [#allocation4], 0
    // Predicated region
    $region2: #{tpu_custom_call.1} parent=1 // pred_check
      _
    $region3: #{tpu_custom_call.1} parent=1 // pred_check_branch
      %18 = sbr.rel (0) target = $region5
    $region4: #{tpu_custom_call.1} parent=1 // pred_region
      %20 = vsyncadd [#allocation3], 0
      %s21 = sshll.u32 %s0, 4
      %s22 = int_to_ptr.hbm [resolvable:$true] %s21
      %s23 = sshll.u32 [#allocation2], 4
      %s24 = int_to_ptr.vmem [resolvable:$true] %s23
      %29 = dma.hbm_to_vmem [thread:$0]  %s22, 128, %s24, [#allocation3], 64, 64, 4
    $region5: #{tpu_custom_call.1} parent=1 // pred_fallthru
      _
    // Predicated region
    $region6: #{tpu_custom_call.1} parent=1 // pred_check
      _
    $region7: #{tpu_custom_call.1} parent=1 // pred_check_branch
      %31 = sbr.rel (0) target = $region9
    $region8: #{tpu_custom_call.1} parent=1 // pred_region
      %33 = vsyncadd [#allocation6], 0
      %s34 = sshll.u32 %s1, 4
      %s35 = int_to_ptr.hbm [resolvable:$true] %s34
      %s36 = sshll.u32 [#allocation5], 4
      %s37 = int_to_ptr.vmem [resolvable:$true] %s36
      %42 = dma.hbm_to_vmem [thread:$0]  %s35, 256, %s37, [#allocation6], 128, 128, 8
    $region9: #{tpu_custom_call.1} parent=1 // pred_fallthru
      _
    // Predicated region
    $region10: #{tpu_custom_call.1} parent=1 // pred_check
      _
    $region11: #{tpu_custom_call.1} parent=1 // pred_check_branch
      %44 = sbr.rel (0) target = $region13
    $region12: #{tpu_custom_call.1} parent=1 // pred_region
      %46 = vsyncadd [#allocation6], 0
      %s47 = sshll.u32 %s2, 4
      %s48 = int_to_ptr.hbm [resolvable:$true] %s47
      %s49 = sshll.u32 [#allocation7], 4
      %s50 = int_to_ptr.vmem [resolvable:$true] %s49
      %55 = dma.hbm_to_vmem [thread:$0]  %s48, 2048, %s50, [#allocation6], 128, 128, 8
    $region13: #{tpu_custom_call.1} parent=1 // pred_fallthru
      _
    // Predicated region
    $region14: #{tpu_custom_call.1} parent=1 // pred_check
      _
    $region15: #{tpu_custom_call.1} parent=1 // pred_check_branch
      %57 = sbr.rel (0) target = $region17
    $region16: #{tpu_custom_call.1} parent=1 // pred_region
      _
    $region17: #{tpu_custom_call.1} parent=1 // pred_fallthru
      _
    // Predicated region
    $region18: #{tpu_custom_call.1} parent=1 // pred_check
      _
    $region19: #{tpu_custom_call.1} parent=1 // pred_check_branch
      %59 = sbr.rel (0) target = $region21
    $region20: #{tpu_custom_call.1} parent=1 // pred_region
      %61 = vsyncadd [#allocation9], 0
      %s62 = sshll.u32 %s4, 4
      %s63 = int_to_ptr.hbm [resolvable:$true] %s62
      %s64 = sshll.u32 [#allocation8], 4
      %s65 = int_to_ptr.vmem [resolvable:$true] %s64
      %70 = dma.hbm_to_vmem [thread:$0]  %s63, 2048, %s65, [#allocation9], 128, 128, 8
    $region21: #{tpu_custom_call.1} parent=1 // pred_fallthru
      _
    // Predicated region
    $region22: #{tpu_custom_call.1} parent=1 // pred_check
      _
    $region23: #{tpu_custom_call.1} parent=1 // pred_check_branch
      %72 = sbr.rel (0) target = $region25
    $region24: #{tpu_custom_call.1} parent=1 // pred_region
      _
    $region25: #{tpu_custom_call.1} parent=1 // pred_fallthru
      _
    // Predicated region
    $region26: #{tpu_custom_call.1} parent=1 // pred_check
      _
    $region27: #{tpu_custom_call.1} parent=1 // pred_check_branch
      %74 = sbr.rel (0) target = $region29
    $region28: #{tpu_custom_call.1} parent=1 // pred_region
      %76 = vsyncadd [#allocation9], 0
      %s78 = sshll.u32 %s6, 4
      %s79 = int_to_ptr.hbm [resolvable:$true] %s78
      %s80 = sshll.u32 [#allocation10], 4
      %s81 = int_to_ptr.vmem [resolvable:$true] %s80
      %83 = dma.hbm_to_vmem [thread:$0]  %s79, 32, %s81, [#allocation9]
    $region29: #{tpu_custom_call.1} parent=1 // pred_fallthru
      _
    // Predicated region
    $region30: #{tpu_custom_call.1} parent=1 // pred_check
      _
    $region31: #{tpu_custom_call.1} parent=1 // pred_check_branch
      %85 = sbr.rel (0) target = $region33
    $region32: #{tpu_custom_call.1} parent=1 // pred_region
      _
    $region33: #{tpu_custom_call.1} parent=1 // pred_fallthru
      _
    // Predicated region
    $region34: #{tpu_custom_call.1} parent=1 // pred_check
      _
    $region35: #{tpu_custom_call.1} parent=1 // pred_check_branch
      %87 = sbr.rel (0) target = $region37
    $region36: #{tpu_custom_call.1} parent=1 // pred_region
      %89 = dma.done [#allocation3], 128
    $region37: #{tpu_custom_call.1} parent=1 // pred_fallthru
      _
    // Predicated region
    $region38: #{tpu_custom_call.1} parent=1 // pred_check
      _
    $region39: #{tpu_custom_call.1} parent=1 // pred_check_branch
      %91 = sbr.rel (0) target = $region41
    $region40: #{tpu_custom_call.1} parent=1 // pred_region
      %93 = dma.done [#allocation6], 256
    $region41: #{tpu_custom_call.1} parent=1 // pred_fallthru
      _
    // Predicated region
    $region42: #{tpu_custom_call.1} parent=1 // pred_check
      _
    $region43: #{tpu_custom_call.1} parent=1 // pred_check_branch
      %95 = sbr.rel (0) target = $region45
    $region44: #{tpu_custom_call.1} parent=1 // pred_region
      %97 = dma.done [#allocation6], 2048
    $region45: #{tpu_custom_call.1} parent=1 // pred_fallthru
      _
    // Predicated region
    $region46: #{tpu_custom_call.1} parent=1 // pred_check
      _
    $region47: #{tpu_custom_call.1} parent=1 // pred_check_branch
      %99 = sbr.rel (0) target = $region49
    $region48: #{tpu_custom_call.1} parent=1 // pred_region
      %101 = dma.done [#allocation9], 2048
    $region49: #{tpu_custom_call.1} parent=1 // pred_fallthru
      _
    // Predicated region
    $region50: #{tpu_custom_call.1} parent=1 // pred_check
      _
    $region51: #{tpu_custom_call.1} parent=1 // pred_check_branch
      %103 = sbr.rel (0) target = $region53
    $region52: #{tpu_custom_call.1} parent=1 // pred_region
      %105 = dma.done [#allocation9], 32
    $region53: #{tpu_custom_call.1} parent=1 // pred_fallthru
      _
    %v106 = vld [vmem:[#allocation2] sm:$0xf]
    %v107 = vld [vmem:[#allocation2 + $0x4] sm:$0xf]
    %v108 = vld [vmem:[#allocation7] sm:$0xff]
    %v109 = vld [vmem:[#allocation7 + $0x8] sm:$0xff]
    %v110 = vld [vmem:[#allocation7 + $0x10] sm:$0xff]
    %v111 = vld [vmem:[#allocation7 + $0x18] sm:$0xff]
    %v112 = vld [vmem:[#allocation7 + $0x20] sm:$0xff]
    %v113 = vld [vmem:[#allocation7 + $0x28] sm:$0xff]
    %v114 = vld [vmem:[#allocation7 + $0x30] sm:$0xff]
    %v115 = vld [vmem:[#allocation7 + $0x38] sm:$0xff]
    %v116 = vld [vmem:[#allocation7 + $0x40] sm:$0xff]
    %v117 = vld [vmem:[#allocation7 + $0x48] sm:$0xff]
    %v118 = vld [vmem:[#allocation7 + $0x50] sm:$0xff]
    %v119 = vld [vmem:[#allocation7 + $0x58] sm:$0xff]
    %v120 = vld [vmem:[#allocation7 + $0x60] sm:$0xff]
    %v121 = vld [vmem:[#allocation7 + $0x68] sm:$0xff]
    %v122 = vld [vmem:[#allocation7 + $0x70] sm:$0xff]
    %v123 = vld [vmem:[#allocation7 + $0x78] sm:$0xff]
    %v124 = vld [vmem:[%s3] sm:$0x3]
    %v126 = vperm.slane %v124, 0
    %v127 = vperm.slane %v124, 1
    %v132 = vunpack.c.l.b16 %v106
    %v133 = vunpack.c.l.b16 %v107
    %v134 = vpack.c.b16 %v133, %v132
    %v152 = vunpack.c.l.b16 %v108
    %v153 = vunpack.c.h.b16 %v108
    %v154 = vunpack.c.l.b16 %v109
    %v155 = vunpack.c.h.b16 %v109
    %v156 = vunpack.c.l.b16 %v110
    %v157 = vunpack.c.h.b16 %v110
    %v158 = vunpack.c.l.b16 %v111
    %v159 = vunpack.c.h.b16 %v111
    %v160 = vunpack.c.l.b16 %v112
    %v161 = vunpack.c.h.b16 %v112
    %v162 = vunpack.c.l.b16 %v113
    %v163 = vunpack.c.h.b16 %v113
    %v164 = vunpack.c.l.b16 %v114
    %v165 = vunpack.c.h.b16 %v114
    %v166 = vunpack.c.l.b16 %v115
    %v167 = vunpack.c.h.b16 %v115
    %v168 = vunpack.c.l.b16 %v116
    %v169 = vunpack.c.h.b16 %v116
    %v170 = vunpack.c.l.b16 %v117
    %v171 = vunpack.c.h.b16 %v117
    %v172 = vunpack.c.l.b16 %v118
    %v173 = vunpack.c.h.b16 %v118
    %v174 = vunpack.c.l.b16 %v119
    %v175 = vunpack.c.h.b16 %v119
    %v176 = vunpack.c.l.b16 %v120
    %v177 = vunpack.c.h.b16 %v120
    %v178 = vunpack.c.l.b16 %v121
    %v179 = vunpack.c.h.b16 %v121
    %v180 = vunpack.c.l.b16 %v122
    %v181 = vunpack.c.h.b16 %v122
    %v182 = vunpack.c.l.b16 %v123
    %v183 = vunpack.c.h.b16 %v123
    %v184 = vpack.c.b16 %v154, %v152
    %v185 = vpack.c.b16 %v155, %v153
    %v186 = vpack.c.b16 %v158, %v156
    %v187 = vpack.c.b16 %v159, %v157
    %v188 = vpack.c.b16 %v162, %v160
    %v189 = vpack.c.b16 %v163, %v161
    %v190 = vpack.c.b16 %v166, %v164
    %v191 = vpack.c.b16 %v167, %v165
    %v192 = vpack.c.b16 %v170, %v168
    %v193 = vpack.c.b16 %v171, %v169
    %v194 = vpack.c.b16 %v174, %v172
    %v195 = vpack.c.b16 %v175, %v173
    %v196 = vpack.c.b16 %v178, %v176
    %v197 = vpack.c.b16 %v179, %v177
    %v198 = vpack.c.b16 %v182, %v180
    %v199 = vpack.c.b16 %v183, %v181
    %216 = vmatpush.bf16.msra.mxu0 %v198
    %217 = vmatpush.bf16.msra.mxu0 %v196
    %218 = vmatpush.bf16.msra.mxu0 %v194
    %219 = vmatpush.bf16.msra.mxu0 %v192
    %220 = vmatpush.bf16.msra.mxu0 %v190
    %221 = vmatpush.bf16.msra.mxu0 %v188
    %222 = vmatpush.bf16.msra.mxu0 %v186
    %223 = vmatpush.bf16.msra.mxu0 %v184
    %224 = vmatmul.bf16.gmra.mxu0 %v134
    %v225 = vpop.f32.mrf.mxu0
    %v226 = vadd.f32 %v126, %v225
    %v227 = vpop.f32.mrf.mxu0
    %v228 = vadd.f32 %v126, %v227
    %229 = vdwg.mxu0
    %230 = vmatpush.bf16.msra.mxu0 %v199
    %231 = vmatpush.bf16.msra.mxu0 %v197
    %232 = vmatpush.bf16.msra.mxu0 %v195
    %233 = vmatpush.bf16.msra.mxu0 %v193
    %234 = vmatpush.bf16.msra.mxu0 %v191
    %235 = vmatpush.bf16.msra.mxu0 %v189
    %236 = vmatpush.bf16.msra.mxu0 %v187
    %237 = vmatpush.bf16.msra.mxu0 %v185
    %238 = vmatmul.bf16.gmra.mxu0 %v134
    %v239 = vpop.f32.mrf.mxu0
    %v240 = vadd.f32 %v127, %v239
    %v241 = vpop.f32.mrf.mxu0
    %v242 = vadd.f32 %v127, %v241
    %243 = vdwg.mxu0
    %v244 = vxor.u32 %v240, 2147483648
    %v245 = vxor.u32 %v242, 2147483648
    %v246 = vmul.f32 %v244, 1.442695
    %v247 = vpow.pop %v246
    %v248 = vmul.f32 %v245, 1.442695
    %v249 = vpow.pop %v248
    %v250 = vadd.f32 %v247, 1.0
    %v251 = vadd.f32 %v249, 1.0
    %v252 = vrcp.pop %v250
    %v253 = vmul.f32 %v250, %v252
    %v254 = vsub.f32 1.0, %v253
    %v255 = vmul.f32 %v252, %v254
    %v256 = vadd.f32 %v252, %v255
    %vm257 = vweird.f32 %v250
    %vm258 = vweird.f32 %v252
    %vm259 = vmor %vm257, %vm258
    %v260 = vsel %vm259, %v252, %v256
    %v261 = vand.u32 2147483647, %v250
    %vm262 = vcmp.eq.f32.partialorder %v261, 8.507059e+37
    %v263 = vand.u32 %v250, 2147483648
    %v264 = vor.u32 1.1754944e-38, %v263
    %v265 = vsel %vm262, %v264, %v260
    %v266 = vmul.f32 1.0, %v265
    %v267 = vrcp.pop %v251
    %v268 = vmul.f32 %v251, %v267
    %v269 = vsub.f32 1.0, %v268
    %v270 = vmul.f32 %v267, %v269
    %v271 = vadd.f32 %v267, %v270
    %vm272 = vweird.f32 %v251
    %vm273 = vweird.f32 %v267
    %vm274 = vmor %vm272, %vm273
    %v275 = vsel %vm274, %v267, %v271
    %v276 = vand.u32 2147483647, %v251
    %vm277 = vcmp.eq.f32.partialorder %v276, 8.507059e+37
    %v278 = vand.u32 %v251, 2147483648
    %v279 = vor.u32 1.1754944e-38, %v278
    %v280 = vsel %vm277, %v279, %v275
    %v281 = vmul.f32 1.0, %v280
    %v282 = vmul.f32 %v226, %v266
    %v283 = vmul.f32 %v228, %v281
    %v284 = vld [vmem:[#allocation5] sm:$0xff]
    %v285 = vld [vmem:[#allocation5 + $0x8] sm:$0xff]
    %v286 = vadd.f32 %v282, %v284
    %v287 = vadd.f32 %v283, %v285
    %v288 = vpack.c.bf16 %v287, %v286
    %v289 = vld [vmem:[#allocation8] sm:$0xff]
    %v290 = vld [vmem:[#allocation8 + $0x8] sm:$0xff]
    %v291 = vld [vmem:[#allocation8 + $0x10] sm:$0xff]
    %v292 = vld [vmem:[#allocation8 + $0x18] sm:$0xff]
    %v293 = vld [vmem:[#allocation8 + $0x20] sm:$0xff]
    %v294 = vld [vmem:[#allocation8 + $0x28] sm:$0xff]
    %v295 = vld [vmem:[#allocation8 + $0x30] sm:$0xff]
    %v296 = vld [vmem:[#allocation8 + $0x38] sm:$0xff]
    %v297 = vld [vmem:[#allocation8 + $0x40] sm:$0xff]
    %v298 = vld [vmem:[#allocation8 + $0x48] sm:$0xff]
    %v299 = vld [vmem:[#allocation8 + $0x50] sm:$0xff]
    %v300 = vld [vmem:[#allocation8 + $0x58] sm:$0xff]
    %v301 = vld [vmem:[#allocation8 + $0x60] sm:$0xff]
    %v302 = vld [vmem:[#allocation8 + $0x68] sm:$0xff]
    %v303 = vld [vmem:[#allocation8 + $0x70] sm:$0xff]
    %v304 = vld [vmem:[#allocation8 + $0x78] sm:$0xff]
    %v305 = vld [vmem:[%s5] sm:$0x3]
    %v307 = vperm.slane %v305, 0
    %v308 = vperm.slane %v305, 1
    %v327 = vunpack.c.l.b16 %v289
    %v328 = vunpack.c.h.b16 %v289
    %v329 = vunpack.c.l.b16 %v290
    %v330 = vunpack.c.h.b16 %v290
    %v331 = vunpack.c.l.b16 %v291
    %v332 = vunpack.c.h.b16 %v291
    %v333 = vunpack.c.l.b16 %v292
    %v334 = vunpack.c.h.b16 %v292
    %v335 = vunpack.c.l.b16 %v293
    %v336 = vunpack.c.h.b16 %v293
    %v337 = vunpack.c.l.b16 %v294
    %v338 = vunpack.c.h.b16 %v294
    %v339 = vunpack.c.l.b16 %v295
    %v340 = vunpack.c.h.b16 %v295
    %v341 = vunpack.c.l.b16 %v296
    %v342 = vunpack.c.h.b16 %v296
    %v343 = vunpack.c.l.b16 %v297
    %v344 = vunpack.c.h.b16 %v297
    %v345 = vunpack.c.l.b16 %v298
    %v346 = vunpack.c.h.b16 %v298
    %v347 = vunpack.c.l.b16 %v299
    %v348 = vunpack.c.h.b16 %v299
    %v349 = vunpack.c.l.b16 %v300
    %v350 = vunpack.c.h.b16 %v300
    %v351 = vunpack.c.l.b16 %v301
    %v352 = vunpack.c.h.b16 %v301
    %v353 = vunpack.c.l.b16 %v302
    %v354 = vunpack.c.h.b16 %v302
    %v355 = vunpack.c.l.b16 %v303
    %v356 = vunpack.c.h.b16 %v303
    %v357 = vunpack.c.l.b16 %v304
    %v358 = vunpack.c.h.b16 %v304
    %v359 = vpack.c.b16 %v329, %v327
    %v360 = vpack.c.b16 %v330, %v328
    %v361 = vpack.c.b16 %v333, %v331
    %v362 = vpack.c.b16 %v334, %v332
    %v363 = vpack.c.b16 %v337, %v335
    %v364 = vpack.c.b16 %v338, %v336
    %v365 = vpack.c.b16 %v341, %v339
    %v366 = vpack.c.b16 %v342, %v340
    %v367 = vpack.c.b16 %v345, %v343
    %v368 = vpack.c.b16 %v346, %v344
    %v369 = vpack.c.b16 %v349, %v347
    %v370 = vpack.c.b16 %v350, %v348
    %v371 = vpack.c.b16 %v353, %v351
    %v372 = vpack.c.b16 %v354, %v352
    %v373 = vpack.c.b16 %v357, %v355
    %v374 = vpack.c.b16 %v358, %v356
    %391 = vmatpush.bf16.msra.mxu0 %v373
    %392 = vmatpush.bf16.msra.mxu0 %v371
    %393 = vmatpush.bf16.msra.mxu0 %v369
    %394 = vmatpush.bf16.msra.mxu0 %v367
    %395 = vmatpush.bf16.msra.mxu0 %v365
    %396 = vmatpush.bf16.msra.mxu0 %v363
    %397 = vmatpush.bf16.msra.mxu0 %v361
    %398 = vmatpush.bf16.msra.mxu0 %v359
    %399 = vmatmul.bf16.gmra.mxu0 %v288
    %v400 = vpop.f32.mrf.mxu0
    %v401 = vadd.f32 %v307, %v400
    %v402 = vpop.f32.mrf.mxu0
    %v403 = vadd.f32 %v307, %v402
    %404 = vdwg.mxu0
    %405 = vmatpush.bf16.msra.mxu0 %v374
    %406 = vmatpush.bf16.msra.mxu0 %v372
    %407 = vmatpush.bf16.msra.mxu0 %v370
    %408 = vmatpush.bf16.msra.mxu0 %v368
    %409 = vmatpush.bf16.msra.mxu0 %v366
    %410 = vmatpush.bf16.msra.mxu0 %v364
    %411 = vmatpush.bf16.msra.mxu0 %v362
    %412 = vmatpush.bf16.msra.mxu0 %v360
    %413 = vmatmul.bf16.gmra.mxu0 %v288
    %v414 = vpop.f32.mrf.mxu0
    %v415 = vadd.f32 %v308, %v414
    %v416 = vpop.f32.mrf.mxu0
    %v417 = vadd.f32 %v308, %v416
    %418 = vdwg.mxu0
    %v419 = vadd.f32 %v401, %v415
    %420 = vadd.xlane.f32.xlu0 %v419
    %v421 = vpop.xlane.xlu0 %420
    %v422 = vadd.f32 %v403, %v417
    %423 = vadd.xlane.f32.xlu0 %v422
    %v424 = vpop.xlane.xlu0 %423
    %v425 = vmul.f32 %v421, 0.00390625
    %v426 = vmul.f32 %v424, 0.00390625
    %v427 = vmul.f32 %v401, %v401
    %v428 = vmul.f32 %v415, %v415
    %v429 = vmul.f32 %v403, %v403
    %v430 = vmul.f32 %v417, %v417
    %v431 = vadd.f32 %v427, %v428
    %432 = vadd.xlane.f32.xlu0 %v431
    %v433 = vpop.xlane.xlu0 %432
    %v434 = vadd.f32 %v429, %v430
    %435 = vadd.xlane.f32.xlu0 %v434
    %v436 = vpop.xlane.xlu0 %435
    %v437 = vmul.f32 %v433, 0.00390625
    %v438 = vmul.f32 %v436, 0.00390625
    %v439 = vmul.f32 %v425, %v425
    %v440 = vmul.f32 %v426, %v426
    %v441 = vsub.f32 %v437, %v439
    %v442 = vsub.f32 %v438, %v440
    %v443 = vmax.f32 %v441, 0.0
    %v444 = vmax.f32 %v442, 0.0
    %v445 = vadd.f32 %v443, 1e-05
    %v446 = vadd.f32 %v444, 1e-05
    %v447 = vrsqrt.pop %v445
    %v448 = vmul.f32 %v447, %v445
    %v449 = vmul.f32 %v448, %v447
    %v450 = vmul.f32 0.5, %v449
    %v451 = vsub.f32 1.5, %v450
    %v452 = vmul.f32 %v447, %v451
    %vm453 = vweird.f32 %v445
    %vm454 = vweird.f32 %v447
    %vm455 = vmor %vm453, %vm454
    %v456 = vsel %vm455, %v447, %v452
    %v457 = vrsqrt.pop %v446
    %v458 = vmul.f32 %v457, %v446
    %v459 = vmul.f32 %v458, %v457
    %v460 = vmul.f32 0.5, %v459
    %v461 = vsub.f32 1.5, %v460
    %v462 = vmul.f32 %v457, %v461
    %vm463 = vweird.f32 %v446
    %vm464 = vweird.f32 %v457
    %vm465 = vmor %vm463, %vm464
    %v466 = vsel %vm465, %v457, %v462
    %v467 = vsub.f32 %v401, %v425
    %v468 = vsub.f32 %v415, %v425
    %v469 = vsub.f32 %v403, %v426
    %v470 = vsub.f32 %v417, %v426
    %v471 = vmul.f32 %v467, %v456
    %v472 = vmul.f32 %v468, %v456
    %v473 = vmul.f32 %v469, %v466
    %v474 = vmul.f32 %v470, %v466
    %v475 = vld [vmem:[#allocation10] sm:$0x3]
    %v477 = vperm.slane %v475, 0
    %v478 = vperm.slane %v475, 1
    %v481 = vmul.f32 %v471, %v477
    %v482 = vmul.f32 %v472, %v478
    %v483 = vmul.f32 %v473, %v477
    %v484 = vmul.f32 %v474, %v478
    %v485 = vld [vmem:[%s7] sm:$0x3]
    %v487 = vperm.slane %v485, 0
    %v488 = vperm.slane %v485, 1
    %v491 = vadd.f32 %v481, %v487
    %v492 = vadd.f32 %v482, %v488
    %v493 = vadd.f32 %v483, %v487
    %v494 = vadd.f32 %v484, %v488
    %495 = vst [vmem:[#allocation11] sm:$0xff] %v491
    %496 = vst [vmem:[#allocation11 + $0x8] sm:$0xff] %v492
    %497 = vst [vmem:[#allocation11 + $0x10] sm:$0xff] %v493
    %498 = vst [vmem:[#allocation11 + $0x18] sm:$0xff] %v494
    // Predicated region
    $region54: #{tpu_custom_call.1} parent=1 // pred_check
      _
    $region55: #{tpu_custom_call.1} parent=1 // pred_check_branch
      %500 = sbr.rel (0) target = $region57
    $region56: #{tpu_custom_call.1} parent=1 // pred_region
      %502 = vsyncadd [#allocation4], 0
      %s503 = sshll.u32 [#allocation11], 4
      %s504 = int_to_ptr.vmem [resolvable:$true] %s503
      %s505 = sshll.u32 %s8, 4
      %s506 = int_to_ptr.hbm [resolvable:$true] %s505
      %511 = dma.vmem_to_hbm [thread:$0]  %s504, 512, %s506, [#allocation4], 256, 256, 16
    $region57: #{tpu_custom_call.1} parent=1 // pred_fallthru
      _
    // Predicated region
    $region58: #{tpu_custom_call.1} parent=1 // pred_check
      _
    $region59: #{tpu_custom_call.1} parent=1 // pred_check_branch
      %513 = sbr.rel (0) target = $region61
    $region60: #{tpu_custom_call.1} parent=1 // pred_region
      %515 = dma.done [#allocation4], 512
    $region61: #{tpu_custom_call.1} parent=1 // pred_fallthru
      _
    %516 = vsyncpa [#allocation3], 1
    %517 = vsyncpa [#allocation6], 1
    %518 = vsyncpa [#allocation9], 1
    %519 = vsyncpa [#allocation4], 1

// kernel: tpu_custom_call.1
$region0: #{tpu_custom_call.1}
  #allocation0 [shape = 'u32[]', space=smem, size = 0x4, offset = 0x4, fixed_abs, tag = 'smem constant byte address 0x4 - core index']
  #allocation1 [shape = 'u32[72,128]{1,0:T(1,128)}', space=vmem, size = 0x9000, scoped, tag = 'internal scratch']
  %s0 = inlined_call_operand.hbm [shape: bf16[16,128], index: 0, kind: input, shape index: {}]
  %s1 = inlined_call_operand.hbm [shape: f32[16,128], index: 1, kind: input, shape index: {}]
  %s2 = inlined_call_operand.hbm [shape: bf16[128,256], index: 2, kind: input, shape index: {}]
  %s3 = inlined_call_operand.vmem [shape: f32[1,256], index: 3, kind: input, shape index: {}]
  %s4 = inlined_call_operand.hbm [shape: bf16[128,256], index: 4, kind: input, shape index: {}]
  %s5 = inlined_call_operand.vmem [shape: f32[1,256], index: 5, kind: input, shape index: {}]
  %s6 = inlined_call_operand.hbm [shape: f32[1,256], index: 6, kind: input, shape index: {}]
  %s7 = inlined_call_operand.vmem [shape: f32[1,256], index: 7, kind: input, shape index: {}]
  %s8 = inlined_call_operand.hbm [shape: f32[16,256], index: 8, kind: output, shape index: {}]
  %s9 = sld [smem:[#allocation0]]
  $region62: #{tpu_custom_call.1} parent=0
    _
  %s11 = ssub.s32 1, %s9
  %s12 = scalar_select 0, %s11, %s9
  $region1: #{tpu_custom_call.1} parent=0
    #allocation2 [shape = 'u8[4096]{0}', space=vmem, size = 0x1000, scoped, tag = 'input window, operand 0, single buffered']
    #allocation3 [shape = 's32[1]{0}', space=sflag, size = 0x4, scoped, tag = 'scoped memory for tpu_custom_call.1']
    #allocation4 [shape = 's32[1]{0}', space=sflag, size = 0x4, scoped, tag = 'scoped memory for tpu_custom_call.1']
    #allocation5 [shape = 'u8[8192]{0}', space=vmem, size = 0x2000, scoped, tag = 'input window, operand 1, single buffered']
    #allocation6 [shape = 's32[1]{0}', space=sflag, size = 0x4, scoped, tag = 'scoped memory for tpu_custom_call.1']
    #allocation7 [shape = 'u8[65536]{0}', space=vmem, size = 0x10000, scoped, tag = 'input window, operand 2, single buffered']
    #allocation8 [shape = 'u8[65536]{0}', space=vmem, size = 0x10000, scoped, tag = 'input window, operand 4, single buffered']
    #allocation9 [shape = 's32[1]{0}', space=sflag, size = 0x4, scoped, tag = 'scoped memory for tpu_custom_call.1']
    #allocation10 [shape = 'u8[1024]{0}', space=vmem, size = 0x400, scoped, tag = 'input window, operand 6, single buffered']
    #allocation11 [shape = 'u8[16384]{0}', space=vmem, size = 0x4000, scoped, tag = 'output window, operand 0, single buffered']
    %13 = vsyncpa [#allocation3], 0
    %14 = vsyncpa [#allocation6], 0
    %15 = vsyncpa [#allocation9], 0
    %16 = vsyncpa [#allocation4], 0
    // Predicated region
    $region2: #{tpu_custom_call.1} parent=1 // pred_check
      _
    $region3: #{tpu_custom_call.1} parent=1 // pred_check_branch
      %18 = sbr.rel (0) target = $region5
    $region4: #{tpu_custom_call.1} parent=1 // pred_region
      %20 = vsyncadd [#allocation3], 0
      %s21 = sshll.u32 %s0, 4
      %s22 = int_to_ptr.hbm [resolvable:$true] %s21
      %s23 = sshll.u32 [#allocation2], 4
      %s24 = int_to_ptr.vmem [resolvable:$true] %s23
      %29 = dma.hbm_to_vmem [thread:$0]  %s22, 128, %s24, [#allocation3], 64, 64, 4
    $region5: #{tpu_custom_call.1} parent=1 // pred_fallthru
      _
    // Predicated region
    $region6: #{tpu_custom_call.1} parent=1 // pred_check
      _
    $region7: #{tpu_custom_call.1} parent=1 // pred_check_branch
      %31 = sbr.rel (0) target = $region9
    $region8: #{tpu_custom_call.1} parent=1 // pred_region
      %33 = vsyncadd [#allocation6], 0
      %s34 = sshll.u32 %s1, 4
      %s35 = int_to_ptr.hbm [resolvable:$true] %s34
      %s36 = sshll.u32 [#allocation5], 4
      %s37 = int_to_ptr.vmem [resolvable:$true] %s36
      %42 = dma.hbm_to_vmem [thread:$0]  %s35, 256, %s37, [#allocation6], 128, 128, 8
    $region9: #{tpu_custom_call.1} parent=1 // pred_fallthru
      _
    // Predicated region
    $region10: #{tpu_custom_call.1} parent=1 // pred_check
      _
    $region11: #{tpu_custom_call.1} parent=1 // pred_check_branch
      %44 = sbr.rel (0) target = $region13
    $region12: #{tpu_custom_call.1} parent=1 // pred_region
      %46 = vsyncadd [#allocation6], 0
      %s47 = sshll.u32 %s2, 4
      %s48 = int_to_ptr.hbm [resolvable:$true] %s47
      %s49 = sshll.u32 [#allocation7], 4
      %s50 = int_to_ptr.vmem [resolvable:$true] %s49
      %55 = dma.hbm_to_vmem [thread:$0]  %s48, 2048, %s50, [#allocation6], 128, 128, 8
    $region13: #{tpu_custom_call.1} parent=1 // pred_fallthru
      _
    // Predicated region
    $region14: #{tpu_custom_call.1} parent=1 // pred_check
      _
    $region15: #{tpu_custom_call.1} parent=1 // pred_check_branch
      %57 = sbr.rel (0) target = $region17
    $region16: #{tpu_custom_call.1} parent=1 // pred_region
      _
    $region17: #{tpu_custom_call.1} parent=1 // pred_fallthru
      _
    // Predicated region
    $region18: #{tpu_custom_call.1} parent=1 // pred_check
      _
    $region19: #{tpu_custom_call.1} parent=1 // pred_check_branch
      %59 = sbr.rel (0) target = $region21
    $region20: #{tpu_custom_call.1} parent=1 // pred_region
      %61 = vsyncadd [#allocation9], 0
      %s62 = sshll.u32 %s4, 4
      %s63 = int_to_ptr.hbm [resolvable:$true] %s62
      %s64 = sshll.u32 [#allocation8], 4
      %s65 = int_to_ptr.vmem [resolvable:$true] %s64
      %70 = dma.hbm_to_vmem [thread:$0]  %s63, 2048, %s65, [#allocation9], 128, 128, 8
    $region21: #{tpu_custom_call.1} parent=1 // pred_fallthru
      _
    // Predicated region
    $region22: #{tpu_custom_call.1} parent=1 // pred_check
      _
    $region23: #{tpu_custom_call.1} parent=1 // pred_check_branch
      %72 = sbr.rel (0) target = $region25
    $region24: #{tpu_custom_call.1} parent=1 // pred_region
      _
    $region25: #{tpu_custom_call.1} parent=1 // pred_fallthru
      _
    // Predicated region
    $region26: #{tpu_custom_call.1} parent=1 // pred_check
      _
    $region27: #{tpu_custom_call.1} parent=1 // pred_check_branch
      %74 = sbr.rel (0) target = $region29
    $region28: #{tpu_custom_call.1} parent=1 // pred_region
      %76 = vsyncadd [#allocation9], 0
      %s78 = sshll.u32 %s6, 4
      %s79 = int_to_ptr.hbm [resolvable:$true] %s78
      %s80 = sshll.u32 [#allocation10], 4
      %s81 = int_to_ptr.vmem [resolvable:$true] %s80
      %83 = dma.hbm_to_vmem [thread:$0]  %s79, 32, %s81, [#allocation9]
    $region29: #{tpu_custom_call.1} parent=1 // pred_fallthru
      _
    // Predicated region
    $region30: #{tpu_custom_call.1} parent=1 // pred_check
      _
    $region31: #{tpu_custom_call.1} parent=1 // pred_check_branch
      %85 = sbr.rel (0) target = $region33
    $region32: #{tpu_custom_call.1} parent=1 // pred_region
      _
    $region33: #{tpu_custom_call.1} parent=1 // pred_fallthru
      _
    // Predicated region
    $region34: #{tpu_custom_call.1} parent=1 // pred_check
      _
    $region35: #{tpu_custom_call.1} parent=1 // pred_check_branch
      %87 = sbr.rel (0) target = $region37
    $region36: #{tpu_custom_call.1} parent=1 // pred_region
      %89 = dma.done [#allocation3], 128
    $region37: #{tpu_custom_call.1} parent=1 // pred_fallthru
      _
    // Predicated region
    $region38: #{tpu_custom_call.1} parent=1 // pred_check
      _
    $region39: #{tpu_custom_call.1} parent=1 // pred_check_branch
      %91 = sbr.rel (0) target = $region41
    $region40: #{tpu_custom_call.1} parent=1 // pred_region
      %93 = dma.done [#allocation6], 256
    $region41: #{tpu_custom_call.1} parent=1 // pred_fallthru
      _
    // Predicated region
    $region42: #{tpu_custom_call.1} parent=1 // pred_check
      _
    $region43: #{tpu_custom_call.1} parent=1 // pred_check_branch
      %95 = sbr.rel (0) target = $region45
    $region44: #{tpu_custom_call.1} parent=1 // pred_region
      %97 = dma.done [#allocation6], 2048
    $region45: #{tpu_custom_call.1} parent=1 // pred_fallthru
      _
    // Predicated region
    $region46: #{tpu_custom_call.1} parent=1 // pred_check
      _
    $region47: #{tpu_custom_call.1} parent=1 // pred_check_branch
      %99 = sbr.rel (0) target = $region49
    $region48: #{tpu_custom_call.1} parent=1 // pred_region
      %101 = dma.done [#allocation9], 2048
    $region49: #{tpu_custom_call.1} parent=1 // pred_fallthru
      _
    // Predicated region
    $region50: #{tpu_custom_call.1} parent=1 // pred_check
      _
    $region51: #{tpu_custom_call.1} parent=1 // pred_check_branch
      %103 = sbr.rel (0) target = $region53
    $region52: #{tpu_custom_call.1} parent=1 // pred_region
      %105 = dma.done [#allocation9], 32
    $region53: #{tpu_custom_call.1} parent=1 // pred_fallthru
      _
    %v106 = vld [vmem:[#allocation2] sm:$0xf]
    %v107 = vld [vmem:[#allocation2 + $0x4] sm:$0xf]
    %v108 = vld [vmem:[#allocation7] sm:$0xff]
    %v109 = vld [vmem:[#allocation7 + $0x8] sm:$0xff]
    %v110 = vld [vmem:[#allocation7 + $0x10] sm:$0xff]
    %v111 = vld [vmem:[#allocation7 + $0x18] sm:$0xff]
    %v112 = vld [vmem:[#allocation7 + $0x20] sm:$0xff]
    %v113 = vld [vmem:[#allocation7 + $0x28] sm:$0xff]
    %v114 = vld [vmem:[#allocation7 + $0x30] sm:$0xff]
    %v115 = vld [vmem:[#allocation7 + $0x38] sm:$0xff]
    %v116 = vld [vmem:[#allocation7 + $0x40] sm:$0xff]
    %v117 = vld [vmem:[#allocation7 + $0x48] sm:$0xff]
    %v118 = vld [vmem:[#allocation7 + $0x50] sm:$0xff]
    %v119 = vld [vmem:[#allocation7 + $0x58] sm:$0xff]
    %v120 = vld [vmem:[#allocation7 + $0x60] sm:$0xff]
    %v121 = vld [vmem:[#allocation7 + $0x68] sm:$0xff]
    %v122 = vld [vmem:[#allocation7 + $0x70] sm:$0xff]
    %v123 = vld [vmem:[#allocation7 + $0x78] sm:$0xff]
    %v124 = vld [vmem:[%s3] sm:$0x3]
    %v126 = vperm.slane %v124, 0
    %v127 = vperm.slane %v124, 1
    %v132 = vunpack.c.l.b16 %v106
    %v133 = vunpack.c.l.b16 %v107
    %v134 = vpack.c.b16 %v133, %v132
    %v152 = vunpack.c.l.b16 %v108
    %v153 = vunpack.c.h.b16 %v108
    %v154 = vunpack.c.l.b16 %v109
    %v155 = vunpack.c.h.b16 %v109
    %v156 = vunpack.c.l.b16 %v110
    %v157 = vunpack.c.h.b16 %v110
    %v158 = vunpack.c.l.b16 %v111
    %v159 = vunpack.c.h.b16 %v111
    %v160 = vunpack.c.l.b16 %v112
    %v161 = vunpack.c.h.b16 %v112
    %v162 = vunpack.c.l.b16 %v113
    %v163 = vunpack.c.h.b16 %v113
    %v164 = vunpack.c.l.b16 %v114
    %v165 = vunpack.c.h.b16 %v114
    %v166 = vunpack.c.l.b16 %v115
    %v167 = vunpack.c.h.b16 %v115
    %v168 = vunpack.c.l.b16 %v116
    %v169 = vunpack.c.h.b16 %v116
    %v170 = vunpack.c.l.b16 %v117
    %v171 = vunpack.c.h.b16 %v117
    %v172 = vunpack.c.l.b16 %v118
    %v173 = vunpack.c.h.b16 %v118
    %v174 = vunpack.c.l.b16 %v119
    %v175 = vunpack.c.h.b16 %v119
    %v176 = vunpack.c.l.b16 %v120
    %v177 = vunpack.c.h.b16 %v120
    %v178 = vunpack.c.l.b16 %v121
    %v179 = vunpack.c.h.b16 %v121
    %v180 = vunpack.c.l.b16 %v122
    %v181 = vunpack.c.h.b16 %v122
    %v182 = vunpack.c.l.b16 %v123
    %v183 = vunpack.c.h.b16 %v123
    %v184 = vpack.c.b16 %v154, %v152
    %v185 = vpack.c.b16 %v155, %v153
    %v186 = vpack.c.b16 %v158, %v156
    %v187 = vpack.c.b16 %v159, %v157
    %v188 = vpack.c.b16 %v162, %v160
    %v189 = vpack.c.b16 %v163, %v161
    %v190 = vpack.c.b16 %v166, %v164
    %v191 = vpack.c.b16 %v167, %v165
    %v192 = vpack.c.b16 %v170, %v168
    %v193 = vpack.c.b16 %v171, %v169
    %v194 = vpack.c.b16 %v174, %v172
    %v195 = vpack.c.b16 %v175, %v173
    %v196 = vpack.c.b16 %v178, %v176
    %v197 = vpack.c.b16 %v179, %v177
    %v198 = vpack.c.b16 %v182, %v180
    %v199 = vpack.c.b16 %v183, %v181
    %216 = vmatpush.bf16.msra.mxu0 %v198
    %217 = vmatpush.bf16.msra.mxu0 %v196
    %218 = vmatpush.bf16.msra.mxu0 %v194
    %219 = vmatpush.bf16.msra.mxu0 %v192
    %220 = vmatpush.bf16.msra.mxu0 %v190
    %221 = vmatpush.bf16.msra.mxu0 %v188
    %222 = vmatpush.bf16.msra.mxu0 %v186
    %223 = vmatpush.bf16.msra.mxu0 %v184
    %224 = vmatmul.bf16.gmra.mxu0 %v134
    %v225 = vpop.f32.mrf.mxu0
    %v226 = vadd.f32 %v126, %v225
    %v227 = vpop.f32.mrf.mxu0
    %v228 = vadd.f32 %v126, %v227
    %229 = vdwg.mxu0
    %230 = vmatpush.bf16.msra.mxu0 %v199
    %231 = vmatpush.bf16.msra.mxu0 %v197
    %232 = vmatpush.bf16.msra.mxu0 %v195
    %233 = vmatpush.bf16.msra.mxu0 %v193
    %234 = vmatpush.bf16.msra.mxu0 %v191
    %235 = vmatpush.bf16.msra.mxu0 %v189
    %236 = vmatpush.bf16.msra.mxu0 %v187
    %237 = vmatpush.bf16.msra.mxu0 %v185
    %238 = vmatmul.bf16.gmra.mxu0 %v134
    %v239 = vpop.f32.mrf.mxu0
    %v240 = vadd.f32 %v127, %v239
    %v241 = vpop.f32.mrf.mxu0
    %v242 = vadd.f32 %v127, %v241
    %243 = vdwg.mxu0
    %v244 = vxor.u32 %v240, 2147483648
    %v245 = vxor.u32 %v242, 2147483648
    %v246 = vmul.f32 %v244, 1.442695
    %v247 = vpow.pop %v246
    %v248 = vmul.f32 %v245, 1.442695
    %v249 = vpow.pop %v248
    %v250 = vadd.f32 %v247, 1.0
    %v251 = vadd.f32 %v249, 1.0
    %v252 = vrcp.pop %v250
    %v253 = vmul.f32 %v250, %v252
    %v254 = vsub.f32 1.0, %v253
    %v255 = vmul.f32 %v252, %v254
    %v256 = vadd.f32 %v252, %v255
    %vm257 = vweird.f32 %v250
    %vm258 = vweird.f32 %v252
    %vm259 = vmor %vm257, %vm258
    %v260 = vsel %vm259, %v252, %v256
    %v261 = vand.u32 2147483647, %v250
    %vm262 = vcmp.eq.f32.partialorder %v261, 8.507059e+37
    %v263 = vand.u32 %v250, 2147483648
    %v264 = vor.u32 1.1754944e-38, %v263
    %v265 = vsel %vm262, %v264, %v260
    %v266 = vmul.f32 1.0, %v265
    %v267 = vrcp.pop %v251
    %v268 = vmul.f32 %v251, %v267
    %v269 = vsub.f32 1.0, %v268
    %v270 = vmul.f32 %v267, %v269
    %v271 = vadd.f32 %v267, %v270
    %vm272 = vweird.f32 %v251
    %vm273 = vweird.f32 %v267
    %vm274 = vmor %vm272, %vm273
    %v275 = vsel %vm274, %v267, %v271
    %v276 = vand.u32 2147483647, %v251
    %vm277 = vcmp.eq.f32.partialorder %v276, 8.507059e+37
    %v278 = vand.u32 %v251, 2147483648
    %v279 = vor.u32 1.1754944e-38, %v278
    %v280 = vsel %vm277, %v279, %v275
    %v281 = vmul.f32 1.0, %v280
    %v282 = vmul.f32 %v226, %v266
    %v283 = vmul.f32 %v228, %v281
    %v284 = vld [vmem:[#allocation5] sm:$0xff]
    %v285 = vld [vmem:[#allocation5 + $0x8] sm:$0xff]
    %v286 = vadd.f32 %v282, %v284
    %v287 = vadd.f32 %v283, %v285
    %v288 = vpack.c.bf16 %v287, %v286
    %v289 = vld [vmem:[#allocation8] sm:$0xff]
    %v290 = vld [vmem:[#allocation8 + $0x8] sm:$0xff]
    %v291 = vld [vmem:[#allocation8 + $0x10] sm:$0xff]
    %v292 = vld [vmem:[#allocation8 + $0x18] sm:$0xff]
    %v293 = vld [vmem:[#allocation8 + $0x20] sm:$0xff]
    %v294 = vld [vmem:[#allocation8 + $0x28] sm:$0xff]
    %v295 = vld [vmem:[#allocation8 + $0x30] sm:$0xff]
    %v296 = vld [vmem:[#allocation8 + $0x38] sm:$0xff]
    %v297 = vld [vmem:[#allocation8 + $0x40] sm:$0xff]
    %v298 = vld [vmem:[#allocation8 + $0x48] sm:$0xff]
    %v299 = vld [vmem:[#allocation8 + $0x50] sm:$0xff]
    %v300 = vld [vmem:[#allocation8 + $0x58] sm:$0xff]
    %v301 = vld [vmem:[#allocation8 + $0x60] sm:$0xff]
    %v302 = vld [vmem:[#allocation8 + $0x68] sm:$0xff]
    %v303 = vld [vmem:[#allocation8 + $0x70] sm:$0xff]
    %v304 = vld [vmem:[#allocation8 + $0x78] sm:$0xff]
    %v305 = vld [vmem:[%s5] sm:$0x3]
    %v307 = vperm.slane %v305, 0
    %v308 = vperm.slane %v305, 1
    %v327 = vunpack.c.l.b16 %v289
    %v328 = vunpack.c.h.b16 %v289
    %v329 = vunpack.c.l.b16 %v290
    %v330 = vunpack.c.h.b16 %v290
    %v331 = vunpack.c.l.b16 %v291
    %v332 = vunpack.c.h.b16 %v291
    %v333 = vunpack.c.l.b16 %v292
    %v334 = vunpack.c.h.b16 %v292
    %v335 = vunpack.c.l.b16 %v293
    %v336 = vunpack.c.h.b16 %v293
    %v337 = vunpack.c.l.b16 %v294
    %v338 = vunpack.c.h.b16 %v294
    %v339 = vunpack.c.l.b16 %v295
    %v340 = vunpack.c.h.b16 %v295
    %v341 = vunpack.c.l.b16 %v296
    %v342 = vunpack.c.h.b16 %v296
    %v343 = vunpack.c.l.b16 %v297
    %v344 = vunpack.c.h.b16 %v297
    %v345 = vunpack.c.l.b16 %v298
    %v346 = vunpack.c.h.b16 %v298
    %v347 = vunpack.c.l.b16 %v299
    %v348 = vunpack.c.h.b16 %v299
    %v349 = vunpack.c.l.b16 %v300
    %v350 = vunpack.c.h.b16 %v300
    %v351 = vunpack.c.l.b16 %v301
    %v352 = vunpack.c.h.b16 %v301
    %v353 = vunpack.c.l.b16 %v302
    %v354 = vunpack.c.h.b16 %v302
    %v355 = vunpack.c.l.b16 %v303
    %v356 = vunpack.c.h.b16 %v303
    %v357 = vunpack.c.l.b16 %v304
    %v358 = vunpack.c.h.b16 %v304
    %v359 = vpack.c.b16 %v329, %v327
    %v360 = vpack.c.b16 %v330, %v328
    %v361 = vpack.c.b16 %v333, %v331
    %v362 = vpack.c.b16 %v334, %v332
    %v363 = vpack.c.b16 %v337, %v335
    %v364 = vpack.c.b16 %v338, %v336
    %v365 = vpack.c.b16 %v341, %v339
    %v366 = vpack.c.b16 %v342, %v340
    %v367 = vpack.c.b16 %v345, %v343
    %v368 = vpack.c.b16 %v346, %v344
    %v369 = vpack.c.b16 %v349, %v347
    %v370 = vpack.c.b16 %v350, %v348
    %v371 = vpack.c.b16 %v353, %v351
    %v372 = vpack.c.b16 %v354, %v352
    %v373 = vpack.c.b16 %v357, %v355
    %v374 = vpack.c.b16 %v358, %v356
    %391 = vmatpush.bf16.msra.mxu0 %v373
    %392 = vmatpush.bf16.msra.mxu0 %v371
    %393 = vmatpush.bf16.msra.mxu0 %v369
    %394 = vmatpush.bf16.msra.mxu0 %v367
    %395 = vmatpush.bf16.msra.mxu0 %v365
    %396 = vmatpush.bf16.msra.mxu0 %v363
    %397 = vmatpush.bf16.msra.mxu0 %v361
    %398 = vmatpush.bf16.msra.mxu0 %v359
    %399 = vmatmul.bf16.gmra.mxu0 %v288
    %v400 = vpop.f32.mrf.mxu0
    %v401 = vadd.f32 %v307, %v400
    %v402 = vpop.f32.mrf.mxu0
    %v403 = vadd.f32 %v307, %v402
    %404 = vdwg.mxu0
    %405 = vmatpush.bf16.msra.mxu0 %v374
    %406 = vmatpush.bf16.msra.mxu0 %v372
    %407 = vmatpush.bf16.msra.mxu0 %v370
    %408 = vmatpush.bf16.msra.mxu0 %v368
    %409 = vmatpush.bf16.msra.mxu0 %v366
    %410 = vmatpush.bf16.msra.mxu0 %v364
    %411 = vmatpush.bf16.msra.mxu0 %v362
    %412 = vmatpush.bf16.msra.mxu0 %v360
    %413 = vmatmul.bf16.gmra.mxu0 %v288
    %v414 = vpop.f32.mrf.mxu0
    %v415 = vadd.f32 %v308, %v414
    %v416 = vpop.f32.mrf.mxu0
    %v417 = vadd.f32 %v308, %v416
    %418 = vdwg.mxu0
    %v419 = vadd.f32 %v401, %v415
    %420 = vadd.xlane.f32.xlu0 %v419
    %v421 = vpop.xlane.xlu0 %420
    %v422 = vadd.f32 %v403, %v417
    %423 = vadd.xlane.f32.xlu0 %v422
    %v424 = vpop.xlane.xlu0 %423
    %v425 = vmul.f32 %v421, 0.00390625
    %v426 = vmul.f32 %v424, 0.00390625
    %v427 = vmul.f32 %v401, %v401
    %v428 = vmul.f32 %v415, %v415
    %v429 = vmul.f32 %v403, %v403
    %v430 = vmul.f32 %v417, %v417
    %v431 = vadd.f32 %v427, %v428
    %432 = vadd.xlane.f32.xlu0 %v431
    %v433 = vpop.xlane.xlu0 %432
    %v434 = vadd.f32 %v429, %v430
    %435 = vadd.xlane.f32.xlu0 %v434
    %v436 = vpop.xlane.xlu0 %435
    %v437 = vmul.f32 %v433, 0.00390625
    %v438 = vmul.f32 %v436, 0.00390625
    %v439 = vmul.f32 %v425, %v425
    %v440 = vmul.f32 %v426, %v426
    %v441 = vsub.f32 %v437, %v439
    %v442 = vsub.f32 %v438, %v440
    %v443 = vmax.f32 %v441, 0.0
    %v444 = vmax.f32 %v442, 0.0
    %v445 = vadd.f32 %v443, 1e-05
    %v446 = vadd.f32 %v444, 1e-05
    %v447 = vrsqrt.pop %v445
    %v448 = vmul.f32 %v447, %v445
    %v449 = vmul.f32 %v448, %v447
    %v450 = vmul.f32 0.5, %v449
    %v451 = vsub.f32 1.5, %v450
    %v452 = vmul.f32 %v447, %v451
    %vm453 = vweird.f32 %v445
    %vm454 = vweird.f32 %v447
    %vm455 = vmor %vm453, %vm454
    %v456 = vsel %vm455, %v447, %v452
    %v457 = vrsqrt.pop %v446
    %v458 = vmul.f32 %v457, %v446
    %v459 = vmul.f32 %v458, %v457
    %v460 = vmul.f32 0.5, %v459
    %v461 = vsub.f32 1.5, %v460
    %v462 = vmul.f32 %v457, %v461
    %vm463 = vweird.f32 %v446
    %vm464 = vweird.f32 %v457
    %vm465 = vmor %vm463, %vm464
    %v466 = vsel %vm465, %v457, %v462
    %v467 = vsub.f32 %v401, %v425
    %v468 = vsub.f32 %v415, %v425
    %v469 = vsub.f32 %v403, %v426
    %v470 = vsub.f32 %v417, %v426
    %v471 = vmul.f32 %v467, %v456
    %v472 = vmul.f32 %v468, %v456
    %v473 = vmul.f32 %v469, %v466
    %v474 = vmul.f32 %v470, %v466
    %v475 = vld [vmem:[#allocation10] sm:$0x3]
    %v477 = vperm.slane %v475, 0
    %v478 = vperm.slane %v475, 1
    %v481 = vmul.f32 %v471, %v477
    %v482 = vmul.f32 %v472, %v478
    %v483 = vmul.f32 %v473, %v477
    %v484 = vmul.f32 %v474, %v478
    %v485 = vld [vmem:[%s7] sm:$0x3]
    %v487 = vperm.slane %v485, 0
    %v488 = vperm.slane %v485, 1
    %v491 = vadd.f32 %v481, %v487
    %v492 = vadd.f32 %v482, %v488
    %v493 = vadd.f32 %v483, %v487
    %v494 = vadd.f32 %v484, %v488
    %495 = vst [vmem:[#allocation11] sm:$0xff] %v491
    %496 = vst [vmem:[#allocation11 + $0x8] sm:$0xff] %v492
    %497 = vst [vmem:[#allocation11 + $0x10] sm:$0xff] %v493
    %498 = vst [vmem:[#allocation11 + $0x18] sm:$0xff] %v494
    // Predicated region
    $region54: #{tpu_custom_call.1} parent=1 // pred_check
      _
    $region55: #{tpu_custom_call.1} parent=1 // pred_check_branch
      %500 = sbr.rel (0) target = $region57
    $region56: #{tpu_custom_call.1} parent=1 // pred_region
      %502 = vsyncadd [#allocation4], 0
      %s503 = sshll.u32 [#allocation11], 4
      %s504 = int_to_ptr.vmem [resolvable:$true] %s503
      %s505 = sshll.u32 %s8, 4
      %s506 = int_to_ptr.hbm [resolvable:$true] %s505
      %511 = dma.vmem_to_hbm [thread:$0]  %s504, 512, %s506, [#allocation4], 256, 256, 16
    $region57: #{tpu_custom_call.1} parent=1 // pred_fallthru
      _
    // Predicated region
    $region58: #{tpu_custom_call.1} parent=1 // pred_check
      _
    $region59: #{tpu_custom_call.1} parent=1 // pred_check_branch
      %513 = sbr.rel (0) target = $region61
    $region60: #{tpu_custom_call.1} parent=1 // pred_region
      %515 = dma.done [#allocation4], 512
    $region61: #{tpu_custom_call.1} parent=1 // pred_fallthru
      _
    %516 = vsyncpa [#allocation3], 1
    %517 = vsyncpa [#allocation6], 1
    %518 = vsyncpa [#allocation9], 1
    %519 = vsyncpa [#allocation4], 1

</llo_original>
